<compile_context>
chip_gen: v5e
topology: v5e:2x2
jax: 0.10.0
libtpu: 0.0.40
codegen_flags: <defaults>
</compile_context>

<pallas_src>
import jax
import jax.numpy as jnp
from jax.experimental import pallas as pl
from jax.experimental.pallas import tpu as pltpu


def _round_up(n, m):
    return ((n + m - 1) // m) * m


def _make_policy_kernel(intervene_layer, compute_dtype):
    """intervene_layer in (None, 'layer1', 'layer2') — baked in at trace time."""

    def kernel(*refs):
        if intervene_layer is None:
            x_ref, w1_ref, b1_ref, w2_ref, b2_ref, w3_ref, b3_ref, o_ref = refs
            add_ref = None
        else:
            (x_ref, w1_ref, b1_ref, w2_ref, b2_ref, w3_ref, b3_ref,
             add_ref, o_ref) = refs

        # Cast to the MXU compute dtype in-kernel (no extra wrapper HBM pass).
        x = x_ref[...].astype(compute_dtype)

        # fc1 + ReLU (f32 accumulation / epilogue)
        z1 = jnp.dot(x, w1_ref[...], preferred_element_type=jnp.float32) + b1_ref[...]
        h1 = jnp.maximum(z1, 0.0)
        if intervene_layer == "layer1":
            h1 = h1 + add_ref[...]

        # fc2 + ReLU
        z2 = jnp.dot(h1.astype(compute_dtype), w2_ref[...],
                     preferred_element_type=jnp.float32) + b2_ref[...]
        h2 = jnp.maximum(z2, 0.0)
        if intervene_layer == "layer2":
            h2 = h2 + add_ref[...]

        # fc3 — output block is exactly (TILE_B, 2): only the 2 real output
        # columns are written back to HBM (masked in-VMEM store, tiny DMA).
        o_ref[...] = (jnp.dot(h2.astype(compute_dtype), w3_ref[...],
                              preferred_element_type=jnp.float32)
                      + b3_ref[...]).astype(o_ref.dtype)

    return kernel


def policy_network_forward(x, params, intervene_on=None,
                           compute_dtype=jnp.float32, tile_b=2048):
    """x: (B, 4) float32. params: dict of (in,out) weights and (1,out) biases."""
    B, f_in = x.shape
    w1, b1 = params["w1"], params["b1"]
    w2, b2 = params["w2"], params["b2"]
    w3, b3 = params["w3"], params["b3"]
    n_out = w3.shape[1]

    # ---- batch tiling (rows). No explicit padding: Pallas masks the ragged
    # edge block; rows are independent so edge garbage never reaches valid
    # output rows. Cap TILE_B so the grid has >= 2 steps for v7x's 2 TCs,
    # and prefer an even step count for balance. Cap at 4096 rows to stay
    # comfortably under v7x's 32 MiB scoped VMEM default (double-buffered
    # x/out blocks + h1/h2 intermediates are a few MiB at 2048 rows).
    TILE_B = max(8, min(_round_up(int(tile_b), 8), 4096,
                        _round_up(pl.cdiv(B, 2), 8)))
    steps = pl.cdiv(B, TILE_B)
    if steps > 2 and steps % 2:
        TILE_B = _round_up(pl.cdiv(B, steps + 1), 8)
        steps = pl.cdiv(B, TILE_B)
    grid = (steps,)

    # MXU inputs in compute dtype (tiny one-time casts); biases stay f32.
    w1_c = w1.astype(compute_dtype)
    w2_c = w2.astype(compute_dtype)
    w3_c = w3.astype(compute_dtype)
    b1_f = b1.astype(jnp.float32)
    b2_f = b2.astype(jnp.float32)
    b3_f = b3.astype(jnp.float32)

    # ---- specs -----------------------------------------------------------
    row_spec = lambda cols: pl.BlockSpec((TILE_B, cols), lambda i: (i, 0))
    const_spec = lambda shape: pl.BlockSpec(shape, lambda i: (0, 0))

    in_specs = [
        row_spec(f_in),
        const_spec(w1_c.shape), const_spec(b1_f.shape),
        const_spec(w2_c.shape), const_spec(b2_f.shape),
        const_spec(w3_c.shape), const_spec(b3_f.shape),
    ]
    operands = [x, w1_c, b1_f, w2_c, b2_f, w3_c, b3_f]

    intervene_layer = None
    if intervene_on is not None:
        intervene_layer = intervene_on["layer"]
        col = jnp.asarray(intervene_on["decoder_col"], jnp.float32).reshape(1, -1)
        add = col * jnp.float32(intervene_on["scale"])
        in_specs.append(const_spec(add.shape))
        operands.append(add)

    out = pl.pallas_call(
        _make_policy_kernel(intervene_layer, compute_dtype),
        out_shape=jax.ShapeDtypeStruct((B, n_out), jnp.float32),
        grid=grid,
        in_specs=in_specs,
        out_specs=row_spec(n_out),
        compiler_params=pltpu.CompilerParams(
            dimension_semantics=("parallel",)),
    )(*operands)

    return out


def init_params(key):
    """PyTorch-default-like init; weights stored transposed as (in, out)."""
    dims = [(4, 128), (128, 64), (64, 2)]
    params = {}
    for i, (fan_in, fan_out) in enumerate(dims, start=1):
        key, kw, kb = jax.random.split(key, 3)
        bound = 1.0 / jnp.sqrt(fan_in)  # U(-1/sqrt(in), 1/sqrt(in))
        params[f"w{i}"] = jax.random.uniform(kw, (fan_in, fan_out), jnp.float32,
                                             minval=-bound, maxval=bound)
        params[f"b{i}"] = jax.random.uniform(kb, (1, fan_out), jnp.float32,
                                             minval=-bound, maxval=bound)
    return params


def _reference_forward(x, params, intervene_on=None):
    h1 = jnp.maximum(x @ params["w1"] + params["b1"], 0.0)
    if intervene_on is not None and intervene_on["layer"] == "layer1":
        h1 = h1 + jnp.asarray(intervene_on["decoder_col"]).reshape(1, -1) * intervene_on["scale"]
    h2 = jnp.maximum(h1 @ params["w2"] + params["b2"], 0.0)
    if intervene_on is not None and intervene_on["layer"] == "layer2":
        h2 = h2 + jnp.asarray(intervene_on["decoder_col"]).reshape(1, -1) * intervene_on["scale"]
    return h2 @ params["w3"] + params["b3"]


if __name__ == "__main__":
    key = jax.random.PRNGKey(0)
    key, kp, kx, kx2, kc1, kc2 = jax.random.split(key, 6)

    params = init_params(kp)

    # --- small batch (single tile), no intervention ---
    B = 8
    x = jax.random.normal(kx, (B, 4), jnp.float32)
    out = jax.block_until_ready(policy_network_forward(x, params))
    ref = _reference_forward(x, params)
    assert out.shape == (B, 2)
    assert jnp.allclose(out, ref, atol=1e-5), "mismatch vs reference (plain)"

    # --- layer1 intervention ---
    iv1 = {"layer": "layer1",
           "decoder_col": jax.random.normal(kc1, (128,), jnp.float32),
           "scale": 0.5}
    out_iv1 = jax.block_until_ready(policy_network_forward(x, params, iv1))
    assert jnp.allclose(out_iv1, _reference_forward(x, params, iv1), atol=1e-5), \
        "mismatch vs reference (layer1 intervention)"

    # --- layer2 intervention ---
    iv2 = {"layer": "layer2",
           "decoder_col": jax.random.normal(kc2, (64,), jnp.float32),
           "scale": -0.25}
    out_iv2 = jax.block_until_ready(policy_network_forward(x, params, iv2))
    assert jnp.allclose(out_iv2, _reference_forward(x, params, iv2), atol=1e-5), \
        "mismatch vs reference (layer2 intervention)"

    # --- larger ragged batch: exercises the 2-step parallel grid + masked edge ---
    B2 = 1000
    x_big = jax.random.normal(kx2, (B2, 4), jnp.float32)
    out_big = jax.block_until_ready(policy_network_forward(x_big, params))
    assert out_big.shape == (B2, 2)
    assert jnp.allclose(out_big, _reference_forward(x_big, params), atol=1e-4), \
        "mismatch vs reference (tiled batch)"

    # --- bf16 compute dtype (v6e/v7x fast path; cast happens in-kernel) ---
    out_bf16 = jax.block_until_ready(
        policy_network_forward(x_big, params, compute_dtype=jnp.bfloat16))
    assert out_bf16.shape == (B2, 2)
    assert jnp.allclose(out_bf16, _reference_forward(x_big, params),
                        atol=5e-2, rtol=5e-2), "mismatch vs reference (bf16)"

    print("KERNEL_OK")
</pallas_src>

<mosaic_0001>
module attributes {stable_mosaic.version = 11 : i64} {
  func.func @kernel(%arg0: i32, %arg1: memref<8x4xf32, #tpu.memory_space<vmem>>, %arg2: memref<4x128xf32, #tpu.memory_space<vmem>>, %arg3: memref<1x128xf32, #tpu.memory_space<vmem>>, %arg4: memref<128x64xf32, #tpu.memory_space<vmem>>, %arg5: memref<1x64xf32, #tpu.memory_space<vmem>>, %arg6: memref<64x2xf32, #tpu.memory_space<vmem>>, %arg7: memref<1x2xf32, #tpu.memory_space<vmem>>, %arg8: memref<8x2xf32, #tpu.memory_space<vmem>>) attributes {dimension_semantics = [#tpu.dimension_semantics<parallel>], iteration_bounds = array<i64: 1>, scalar_prefetch = 0 : i64, scratch_operands = 0 : i64, tpu.core_type = #tpu.core_type<tc>, window_params = [{transform_indices = @transform_0, window_bounds = array<i64: 8, 4>}, {pipeline_mode = #tpu.pipeline_mode<synchronous>, transform_indices = @transform_1, window_bounds = array<i64: 4, 128>}, {pipeline_mode = #tpu.pipeline_mode<synchronous>, transform_indices = @transform_2, window_bounds = array<i64: 1, 128>}, {pipeline_mode = #tpu.pipeline_mode<synchronous>, transform_indices = @transform_3, window_bounds = array<i64: 128, 64>}, {pipeline_mode = #tpu.pipeline_mode<synchronous>, transform_indices = @transform_4, window_bounds = array<i64: 1, 64>}, {pipeline_mode = #tpu.pipeline_mode<synchronous>, transform_indices = @transform_5, window_bounds = array<i64: 64, 2>}, {pipeline_mode = #tpu.pipeline_mode<synchronous>, transform_indices = @transform_6, window_bounds = array<i64: 1, 2>}, {transform_indices = @transform_7, window_bounds = array<i64: 8, 2>}]} {
    %c0 = arith.constant 0 : index
    %c0_0 = arith.constant 0 : index
    %0 = vector.load %arg1[%c0, %c0_0] : memref<8x4xf32, #tpu.memory_space<vmem>>, vector<8x4xf32>
    %c0_1 = arith.constant 0 : index
    %c0_2 = arith.constant 0 : index
    %1 = vector.load %arg2[%c0_1, %c0_2] : memref<4x128xf32, #tpu.memory_space<vmem>>, vector<4x128xf32>
    %cst = arith.constant dense<0.000000e+00> : vector<8x128xf32>
    %2 = tpu.matmul %0, %1, %cst {dimension_numbers = #tpu.dot_dimension_numbers<[1], [0], [0], [1], [0, 0, 1, 1], [], []>} : vector<8x4xf32>, vector<4x128xf32>, vector<8x128xf32> -> vector<8x128xf32>
    %c0_3 = arith.constant 0 : index
    %c0_4 = arith.constant 0 : index
    %3 = vector.load %arg3[%c0_3, %c0_4] : memref<1x128xf32, #tpu.memory_space<vmem>>, vector<1x128xf32>
    %4 = vector.broadcast %3 : vector<1x128xf32> to vector<8x128xf32>
    %5 = arith.addf %2, %4 : vector<8x128xf32>
    %cst_5 = arith.constant 0.000000e+00 : f32
    %6 = vector.broadcast %cst_5 : f32 to vector<8x128xf32>
    %7 = arith.maximumf %5, %6 : vector<8x128xf32>
    %c0_6 = arith.constant 0 : index
    %c0_7 = arith.constant 0 : index
    %8 = vector.load %arg4[%c0_6, %c0_7] : memref<128x64xf32, #tpu.memory_space<vmem>>, vector<128x64xf32>
    %cst_8 = arith.constant dense<0.000000e+00> : vector<8x64xf32>
    %9 = tpu.matmul %7, %8, %cst_8 {dimension_numbers = #tpu.dot_dimension_numbers<[1], [0], [0], [1], [0, 0, 1, 1], [], []>} : vector<8x128xf32>, vector<128x64xf32>, vector<8x64xf32> -> vector<8x64xf32>
    %c0_9 = arith.constant 0 : index
    %c0_10 = arith.constant 0 : index
    %10 = vector.load %arg5[%c0_9, %c0_10] : memref<1x64xf32, #tpu.memory_space<vmem>>, vector<1x64xf32>
    %11 = vector.broadcast %10 : vector<1x64xf32> to vector<8x64xf32>
    %12 = arith.addf %9, %11 : vector<8x64xf32>
    %cst_11 = arith.constant 0.000000e+00 : f32
    %13 = vector.broadcast %cst_11 : f32 to vector<8x64xf32>
    %14 = arith.maximumf %12, %13 : vector<8x64xf32>
    %c0_12 = arith.constant 0 : index
    %c0_13 = arith.constant 0 : index
    %15 = vector.load %arg6[%c0_12, %c0_13] : memref<64x2xf32, #tpu.memory_space<vmem>>, vector<64x2xf32>
    %cst_14 = arith.constant dense<0.000000e+00> : vector<8x2xf32>
    %16 = tpu.matmul %14, %15, %cst_14 {dimension_numbers = #tpu.dot_dimension_numbers<[1], [0], [0], [1], [0, 0, 1, 1], [], []>} : vector<8x64xf32>, vector<64x2xf32>, vector<8x2xf32> -> vector<8x2xf32>
    %c0_15 = arith.constant 0 : index
    %c0_16 = arith.constant 0 : index
    %17 = vector.load %arg7[%c0_15, %c0_16] : memref<1x2xf32, #tpu.memory_space<vmem>>, vector<1x2xf32>
    %18 = vector.broadcast %17 : vector<1x2xf32> to vector<8x2xf32>
    %19 = arith.addf %16, %18 : vector<8x2xf32>
    %c0_17 = arith.constant 0 : index
    %c0_18 = arith.constant 0 : index
    %20 = vector.load %arg8[%c0_17, %c0_18] : memref<8x2xf32, #tpu.memory_space<vmem>>, vector<8x2xf32>
    tpu.vector_store %arg8[%c0_17, %c0_18], %19 {strides = array<i32>} : memref<8x2xf32, #tpu.memory_space<vmem>>, vector<8x2xf32>,
    return
  }
  func.func @transform_0(%arg0: i32) -> (i32, i32) {
    %c0_i32 = arith.constant 0 : i32
    %c0_i32_0 = arith.constant 0 : i32
    return %arg0, %c0_i32 : i32, i32
  }
  func.func @transform_1(%arg0: i32) -> (i32, i32) {
    %c0_i32 = arith.constant 0 : i32
    %c0_i32_0 = arith.constant 0 : i32
    %c0_i32_1 = arith.constant 0 : i32
    return %c0_i32, %c0_i32_0 : i32, i32
  }
  func.func @transform_2(%arg0: i32) -> (i32, i32) {
    %c0_i32 = arith.constant 0 : i32
    %c0_i32_0 = arith.constant 0 : i32
    %c0_i32_1 = arith.constant 0 : i32
    return %c0_i32, %c0_i32_0 : i32, i32
  }
  func.func @transform_3(%arg0: i32) -> (i32, i32) {
    %c0_i32 = arith.constant 0 : i32
    %c0_i32_0 = arith.constant 0 : i32
    %c0_i32_1 = arith.constant 0 : i32
    return %c0_i32, %c0_i32_0 : i32, i32
  }
  func.func @transform_4(%arg0: i32) -> (i32, i32) {
    %c0_i32 = arith.constant 0 : i32
    %c0_i32_0 = arith.constant 0 : i32
    %c0_i32_1 = arith.constant 0 : i32
    return %c0_i32, %c0_i32_0 : i32, i32
  }
  func.func @transform_5(%arg0: i32) -> (i32, i32) {
    %c0_i32 = arith.constant 0 : i32
    %c0_i32_0 = arith.constant 0 : i32
    %c0_i32_1 = arith.constant 0 : i32
    return %c0_i32, %c0_i32_0 : i32, i32
  }
  func.func @transform_6(%arg0: i32) -> (i32, i32) {
    %c0_i32 = arith.constant 0 : i32
    %c0_i32_0 = arith.constant 0 : i32
    %c0_i32_1 = arith.constant 0 : i32
    return %c0_i32, %c0_i32_0 : i32, i32
  }
  func.func @transform_7(%arg0: i32) -> (i32, i32) {
    %c0_i32 = arith.constant 0 : i32
    %c0_i32_0 = arith.constant 0 : i32
    return %arg0, %c0_i32 : i32, i32
  }
}

</mosaic_0001>

<llo_original>
// kernel: tpu_custom_call.1
$region0: #{tpu_custom_call.1}
  #allocation0 [shape = 'u32[]', space=smem, size = 0x4, offset = 0x4, fixed_abs, tag = 'smem constant byte address 0x4 - core index']
  #allocation1 [shape = 'u32[72,128]{1,0:T(1,128)}', space=vmem, size = 0x9000, scoped, tag = 'internal scratch']
  %s0 = inlined_call_operand.vmem [shape: f32[8,4], index: 0, kind: input, shape index: {}]
  %s1 = inlined_call_operand.vmem [shape: f32[4,128], index: 1, kind: input, shape index: {}]
  %s2 = inlined_call_operand.vmem [shape: f32[1,128], index: 2, kind: input, shape index: {}]
  %s3 = inlined_call_operand.vmem [shape: f32[128,64], index: 3, kind: input, shape index: {}]
  %s4 = inlined_call_operand.vmem [shape: f32[1,64], index: 4, kind: input, shape index: {}]
  %s5 = inlined_call_operand.vmem [shape: f32[64,2], index: 5, kind: input, shape index: {}]
  %s6 = inlined_call_operand.vmem [shape: f32[1,2], index: 6, kind: input, shape index: {}]
  %s7 = inlined_call_operand.vmem [shape: f32[8,2], index: 7, kind: output, shape index: {}]
  %s8 = sld [smem:[#allocation0]]
  $region38: #{tpu_custom_call.1} parent=0
    _
  %s10 = ssub.s32 1, %s8
  %s11 = scalar_select 0, %s10, %s8
  // Predicated region
  $region2: #{tpu_custom_call.1} parent=0 // pred_check
    _
  $region3: #{tpu_custom_call.1} parent=0 // pred_check_branch
    %13 = sbr.rel (0) target = $region5
  $region4: #{tpu_custom_call.1} parent=0 // pred_region
    _
  $region5: #{tpu_custom_call.1} parent=0 // pred_fallthru
    _
  // Predicated region
  $region6: #{tpu_custom_call.1} parent=0 // pred_check
    _
  $region7: #{tpu_custom_call.1} parent=0 // pred_check_branch
    %15 = sbr.rel (0) target = $region9
  $region8: #{tpu_custom_call.1} parent=0 // pred_region
    _
  $region9: #{tpu_custom_call.1} parent=0 // pred_fallthru
    _
  // Predicated region
  $region10: #{tpu_custom_call.1} parent=0 // pred_check
    _
  $region11: #{tpu_custom_call.1} parent=0 // pred_check_branch
    %17 = sbr.rel (0) target = $region13
  $region12: #{tpu_custom_call.1} parent=0 // pred_region
    _
  $region13: #{tpu_custom_call.1} parent=0 // pred_fallthru
    _
  // Predicated region
  $region14: #{tpu_custom_call.1} parent=0 // pred_check
    _
  $region15: #{tpu_custom_call.1} parent=0 // pred_check_branch
    %19 = sbr.rel (0) target = $region17
  $region16: #{tpu_custom_call.1} parent=0 // pred_region
    _
  $region17: #{tpu_custom_call.1} parent=0 // pred_fallthru
    _
  // Predicated region
  $region18: #{tpu_custom_call.1} parent=0 // pred_check
    _
  $region19: #{tpu_custom_call.1} parent=0 // pred_check_branch
    %21 = sbr.rel (0) target = $region21
  $region20: #{tpu_custom_call.1} parent=0 // pred_region
    _
  $region21: #{tpu_custom_call.1} parent=0 // pred_fallthru
    _
  // Predicated region
  $region22: #{tpu_custom_call.1} parent=0 // pred_check
    _
  $region23: #{tpu_custom_call.1} parent=0 // pred_check_branch
    %23 = sbr.rel (0) target = $region25
  $region24: #{tpu_custom_call.1} parent=0 // pred_region
    _
  $region25: #{tpu_custom_call.1} parent=0 // pred_fallthru
    _
  // Predicated region
  $region26: #{tpu_custom_call.1} parent=0 // pred_check
    _
  $region27: #{tpu_custom_call.1} parent=0 // pred_check_branch
    %25 = sbr.rel (0) target = $region29
  $region28: #{tpu_custom_call.1} parent=0 // pred_region
    _
  $region29: #{tpu_custom_call.1} parent=0 // pred_fallthru
    _
  %v26 = vld [vmem:[%s0] sm:$0xff]
  %v27 = vld [vmem:[%s1] sm:$0xf]
  %v28 = vld [vmem:[%s2] sm:$0x1]
  %v30 = vperm.slane %v28, 0
  %vm32 = vcmask 31744
  %v34 = vsel %vm32, %v26, 0
  %vm36 = vcmask 1043456
  %v38 = vsel %vm36, %v27, 0
  %40 = vmatpush.msra.mxu0 0.0
  %41 = vmatpush.msra.mxu0 0.0
  %42 = vmatpush.msra.mxu0 0.0
  %43 = vmatpush.msra.mxu0 0.0
  %44 = vmatpush.msra.mxu0 0.0
  %45 = vmatpush.msra.mxu0 0.0
  %46 = vmatpush.msra.mxu0 0.0
  %47 = vmatpush.msra.mxu0 0.0
  %48 = vmatpush.msra.mxu0 0.0
  %49 = vmatpush.msra.mxu0 0.0
  %50 = vmatpush.msra.mxu0 0.0
  %51 = vmatpush.msra.mxu0 0.0
  %52 = vmatpush.msra.mxu0 0.0
  %53 = vmatpush.msra.mxu0 0.0
  %54 = vmatpush.msra.mxu0 0.0
  %55 = vmatpush.msra.mxu0 %v38
  %56 = vmatmul.f32.gmra.mxu0 %v34
  %v57 = vpop.f32.mrf.mxu0
  %v58 = vadd.f32 %v30, %v57
  %59 = vdwg.mxu0
  %v60 = vmax.f32 %v58, 0.0
  %v61 = vld [vmem:[%s3] sm:$0xff]
  %v62 = vld [vmem:[%s3 + $0x8] sm:$0xff]
  %v63 = vld [vmem:[%s3 + $0x10] sm:$0xff]
  %v64 = vld [vmem:[%s3 + $0x18] sm:$0xff]
  %v65 = vld [vmem:[%s3 + $0x20] sm:$0xff]
  %v66 = vld [vmem:[%s3 + $0x28] sm:$0xff]
  %v67 = vld [vmem:[%s3 + $0x30] sm:$0xff]
  %v68 = vld [vmem:[%s3 + $0x38] sm:$0xff]
  %v69 = vld [vmem:[%s3 + $0x40] sm:$0xff]
  %v70 = vld [vmem:[%s3 + $0x48] sm:$0xff]
  %v71 = vld [vmem:[%s3 + $0x50] sm:$0xff]
  %v72 = vld [vmem:[%s3 + $0x58] sm:$0xff]
  %v73 = vld [vmem:[%s3 + $0x60] sm:$0xff]
  %v74 = vld [vmem:[%s3 + $0x68] sm:$0xff]
  %v75 = vld [vmem:[%s3 + $0x70] sm:$0xff]
  %v76 = vld [vmem:[%s3 + $0x78] sm:$0xff]
  %v77 = vld [vmem:[%s4] sm:$0x1]
  %v79 = vperm.slane %v77, 0
  %81 = vmatpush.msra.mxu0 %v76
  %82 = vmatpush.msra.mxu0 %v75
  %83 = vmatpush.msra.mxu0 %v74
  %84 = vmatpush.msra.mxu0 %v73
  %85 = vmatpush.msra.mxu0 %v72
  %86 = vmatpush.msra.mxu0 %v71
  %87 = vmatpush.msra.mxu0 %v70
  %88 = vmatpush.msra.mxu0 %v69
  %89 = vmatpush.msra.mxu0 %v68
  %90 = vmatpush.msra.mxu0 %v67
  %91 = vmatpush.msra.mxu0 %v66
  %92 = vmatpush.msra.mxu0 %v65
  %93 = vmatpush.msra.mxu0 %v64
  %94 = vmatpush.msra.mxu0 %v63
  %95 = vmatpush.msra.mxu0 %v62
  %96 = vmatpush.msra.mxu0 %v61
  %97 = vmatmul.f32.gmra.mxu0 %v60
  %v98 = vpop.f32.mrf.mxu0
  %v99 = vadd.f32 %v79, %v98
  %100 = vdwg.mxu0
  %v101 = vmax.f32 %v99, 0.0
  %v102 = vld [vmem:[%s5] sm:$0xff]
  %v103 = vld [vmem:[%s5 + $0x8] sm:$0xff]
  %v104 = vld [vmem:[%s5 + $0x10] sm:$0xff]
  %v105 = vld [vmem:[%s5 + $0x18] sm:$0xff]
  %v106 = vld [vmem:[%s5 + $0x20] sm:$0xff]
  %v107 = vld [vmem:[%s5 + $0x28] sm:$0xff]
  %v108 = vld [vmem:[%s5 + $0x30] sm:$0xff]
  %v109 = vld [vmem:[%s5 + $0x38] sm:$0xff]
  %v110 = vld [vmem:[%s6] sm:$0x1]
  %v112 = vperm.slane %v110, 0
  %vm114 = vcmask 523264
  %v116 = vsel %vm114, %v101, 0
  %118 = vmatpush.msra.mxu0 0.0
  %119 = vmatpush.msra.mxu0 0.0
  %120 = vmatpush.msra.mxu0 0.0
  %121 = vmatpush.msra.mxu0 0.0
  %122 = vmatpush.msra.mxu0 0.0
  %123 = vmatpush.msra.mxu0 0.0
  %124 = vmatpush.msra.mxu0 0.0
  %125 = vmatpush.msra.mxu0 0.0
  %126 = vmatpush.msra.mxu0 %v109
  %127 = vmatpush.msra.mxu0 %v108
  %128 = vmatpush.msra.mxu0 %v107
  %129 = vmatpush.msra.mxu0 %v106
  %130 = vmatpush.msra.mxu0 %v105
  %131 = vmatpush.msra.mxu0 %v104
  %132 = vmatpush.msra.mxu0 %v103
  %133 = vmatpush.msra.mxu0 %v102
  %134 = vmatmul.f32.gmra.mxu0 %v116
  %v135 = vpop.f32.mrf.mxu0
  %v136 = vadd.f32 %v112, %v135
  %137 = vdwg.mxu0
  %vm138 = vcmask 15360
  %139 = vst.msk [vmem:[%s7] sm:$0xff] %vm138, %v136
  // Predicated region
  $region30: #{tpu_custom_call.1} parent=0 // pred_check
    _
  $region31: #{tpu_custom_call.1} parent=0 // pred_check_branch
    %141 = sbr.rel (0) target = $region33
  $region32: #{tpu_custom_call.1} parent=0 // pred_region
    _
  $region33: #{tpu_custom_call.1} parent=0 // pred_fallthru
    _
  // Predicated region
  $region34: #{tpu_custom_call.1} parent=0 // pred_check
    _
  $region35: #{tpu_custom_call.1} parent=0 // pred_check_branch
    %143 = sbr.rel (0) target = $region37
  $region36: #{tpu_custom_call.1} parent=0 // pred_region
    _
  $region37: #{tpu_custom_call.1} parent=0 // pred_fallthru
    _

</llo_original>
